<compile_context>
chip_gen: v7x
topology: tpu7x:2x2x1
jax: 0.10.0
libtpu: 0.0.40
codegen_flags: <defaults>
</compile_context>

<pallas_src>
import jax
import jax.numpy as jnp
from jax.experimental import pallas as pl
from jax.experimental.pallas import tpu as pltpu


def _round_up(x: int, m: int) -> int:
    return ((x + m - 1) // m) * m


def _giou_loss_kernel(boxes_ref, out_ref):
    # boxes_ref: (8, TS, L) f32 in VMEM; out_ref: (TS, L) f32.
    px1 = boxes_ref[0]
    py1 = boxes_ref[1]
    px2 = boxes_ref[2]
    py2 = boxes_ref[3]
    tx1 = boxes_ref[4]
    ty1 = boxes_ref[5]
    tx2 = boxes_ref[6]
    ty2 = boxes_ref[7]

    area_p = (px2 - px1) * (py2 - py1)
    area_t = (tx2 - tx1) * (ty2 - ty1)

    # intersection
    iw = jnp.maximum(jnp.minimum(px2, tx2) - jnp.maximum(px1, tx1), 0.0)
    ih = jnp.maximum(jnp.minimum(py2, ty2) - jnp.maximum(py1, ty1), 0.0)
    inter = iw * ih
    union = area_p + area_t - inter

    # smallest enclosing box
    ew = jnp.maximum(jnp.maximum(px2, tx2) - jnp.minimum(px1, tx1), 0.0)
    eh = jnp.maximum(jnp.maximum(py2, ty2) - jnp.minimum(py1, ty1), 0.0)
    enclose = ew * eh

    # loss = 1 - (iou - (enclose - union)/enclose) = 2 - inter/union - union/enclose
    inv_union = pl.reciprocal(union, approx=True)      # EUP slot
    inv_enclose = pl.reciprocal(enclose, approx=True)  # EUP slot
    out_ref[...] = 2.0 - inter * inv_union - union * inv_enclose


def giou_loss_packed(packed: jax.Array, *, sub_tile: int) -> jax.Array:
    """Coordinate-major entry point.

    packed: (8, S, L) float32, planes [px1,py1,px2,py2,tx1,ty1,tx2,ty2],
    S % sub_tile == 0, sub_tile % 8 == 0, L % 128 == 0.
    Returns (S, L) GIoU loss.
    """
    planes, s_total, lanes = packed.shape
    assert planes == 8
    assert sub_tile % 8 == 0 and lanes % 128 == 0 and s_total % sub_tile == 0
    num_tiles = s_total // sub_tile

    return pl.pallas_call(
        _giou_loss_kernel,
        out_shape=jax.ShapeDtypeStruct((s_total, lanes), jnp.float32),
        grid=(num_tiles,),
        in_specs=[pl.BlockSpec((8, sub_tile, lanes), lambda i: (0, i, 0))],
        out_specs=pl.BlockSpec((sub_tile, lanes), lambda i: (i, 0)),
        compiler_params=pltpu.CompilerParams(
            dimension_semantics=("parallel",),
        ),
    )(packed)


def giou_loss(inputs: jax.Array, target: jax.Array) -> jax.Array:
    """inputs, target: (N, 4) xyxy boxes -> (N,) GIoU loss (float32)."""
    assert inputs.shape == target.shape and inputs.shape[-1] == 4
    n = inputs.shape[0]

    # Tiling choice: lane dim multiple of 128, sublane tile multiple of 8,
    # ~0.5-1 MiB input blocks for large N (double-buffered, fits v5e/v7x VMEM).
    lanes = 512 if n > 8 * 1024 else 128
    sub_tile = min(64, _round_up(pl.cdiv(n, lanes), 8))
    tile = lanes * sub_tile
    num_tiles = pl.cdiv(n, tile)
    n_pad = num_tiles * tile

    # Layout glue (pure XLA relayout): pack into coordinate-major (8, S, L).
    # Production callers that already hold this layout should call
    # giou_loss_packed directly and avoid this extra HBM pass.
    cat = jnp.concatenate(
        [jnp.asarray(inputs, jnp.float32), jnp.asarray(target, jnp.float32)],
        axis=1,
    )  # (N, 8)
    if n_pad > n:
        filler = jnp.broadcast_to(
            jnp.array([0.0, 0.0, 1.0, 1.0, 0.0, 0.0, 1.0, 1.0], jnp.float32),
            (n_pad - n, 8),
        )  # valid unit boxes -> loss 0, no 0/0 NaNs in padded lanes
        cat = jnp.concatenate([cat, filler], axis=0)
    packed = cat.T.reshape(8, num_tiles * sub_tile, lanes)

    out = giou_loss_packed(packed, sub_tile=sub_tile)
    return out.reshape(-1)[:n]


def _reference_giou_loss(inputs, target):
    """Pure-JAX reference mirroring torchvision generalized_box_iou diagonal."""
    px1, py1, px2, py2 = [inputs[:, k] for k in range(4)]
    tx1, ty1, tx2, ty2 = [target[:, k] for k in range(4)]
    area_p = (px2 - px1) * (py2 - py1)
    area_t = (tx2 - tx1) * (ty2 - ty1)
    iw = jnp.maximum(jnp.minimum(px2, tx2) - jnp.maximum(px1, tx1), 0.0)
    ih = jnp.maximum(jnp.minimum(py2, ty2) - jnp.maximum(py1, ty1), 0.0)
    inter = iw * ih
    union = area_p + area_t - inter
    iou = inter / union
    ew = jnp.maximum(jnp.maximum(px2, tx2) - jnp.minimum(px1, tx1), 0.0)
    eh = jnp.maximum(jnp.maximum(py2, ty2) - jnp.minimum(py1, ty1), 0.0)
    enclose = ew * eh
    giou = iou - (enclose - union) / enclose
    return 1.0 - giou


if __name__ == "__main__":
    key = jax.random.PRNGKey(0)
    k1, k2, k3, k4 = jax.random.split(key, 4)

    N = 37  # number of box pairs (non-multiple of tile -> exercises padding)
    # Build valid xyxy boxes: x2 >= x1, y2 >= y1.
    xy_p = jax.random.uniform(k1, (N, 2), jnp.float32, 0.0, 10.0)
    wh_p = jax.random.uniform(k2, (N, 2), jnp.float32, 0.5, 5.0)
    xy_t = jax.random.uniform(k3, (N, 2), jnp.float32, 0.0, 10.0)
    wh_t = jax.random.uniform(k4, (N, 2), jnp.float32, 0.5, 5.0)

    inputs = jnp.concatenate([xy_p, xy_p + wh_p], axis=1)  # (N, 4)
    target = jnp.concatenate([xy_t, xy_t + wh_t], axis=1)  # (N, 4)

    loss = giou_loss(inputs, target)
    jax.block_until_ready(loss)

    ref = _reference_giou_loss(inputs, target)
    assert loss.shape == (N,)
    assert bool(jnp.all(jnp.isfinite(loss)))
    # approx EUP reciprocal path -> tolerance a bit above f32-exact; values O(1).
    assert jnp.allclose(loss, ref, atol=2e-3, rtol=2e-3), (loss, ref)

    print("KERNEL_OK")
</pallas_src>

<mosaic_0001>
module attributes {stable_mosaic.version = 11 : i64} {
  func.func @_giou_loss_kernel(%arg0: i32, %arg1: memref<8x8x128xf32, #tpu.memory_space<vmem>>, %arg2: memref<8x128xf32, #tpu.memory_space<vmem>>) attributes {dimension_semantics = [#tpu.dimension_semantics<parallel>], iteration_bounds = array<i64: 1>, scalar_prefetch = 0 : i64, scratch_operands = 0 : i64, tpu.core_type = #tpu.core_type<tc>, window_params = [{transform_indices = @transform_0, window_bounds = array<i64: 8, 8, 128>}, {transform_indices = @transform_1, window_bounds = array<i64: 8, 128>}]} {
    %c0 = arith.constant 0 : index
    %c0_0 = arith.constant 0 : index
    %c0_1 = arith.constant 0 : index
    %0 = vector.load %arg1[%c0, %c0_0, %c0_1] : memref<8x8x128xf32, #tpu.memory_space<vmem>>, vector<1x8x128xf32>
    %1 = vector.shape_cast %0 : vector<1x8x128xf32> to vector<8x128xf32>
    %c1 = arith.constant 1 : index
    %c0_2 = arith.constant 0 : index
    %c0_3 = arith.constant 0 : index
    %2 = vector.load %arg1[%c1, %c0_2, %c0_3] : memref<8x8x128xf32, #tpu.memory_space<vmem>>, vector<1x8x128xf32>
    %3 = vector.shape_cast %2 : vector<1x8x128xf32> to vector<8x128xf32>
    %c2 = arith.constant 2 : index
    %c0_4 = arith.constant 0 : index
    %c0_5 = arith.constant 0 : index
    %4 = vector.load %arg1[%c2, %c0_4, %c0_5] : memref<8x8x128xf32, #tpu.memory_space<vmem>>, vector<1x8x128xf32>
    %5 = vector.shape_cast %4 : vector<1x8x128xf32> to vector<8x128xf32>
    %c3 = arith.constant 3 : index
    %c0_6 = arith.constant 0 : index
    %c0_7 = arith.constant 0 : index
    %6 = vector.load %arg1[%c3, %c0_6, %c0_7] : memref<8x8x128xf32, #tpu.memory_space<vmem>>, vector<1x8x128xf32>
    %7 = vector.shape_cast %6 : vector<1x8x128xf32> to vector<8x128xf32>
    %c4 = arith.constant 4 : index
    %c0_8 = arith.constant 0 : index
    %c0_9 = arith.constant 0 : index
    %8 = vector.load %arg1[%c4, %c0_8, %c0_9] : memref<8x8x128xf32, #tpu.memory_space<vmem>>, vector<1x8x128xf32>
    %9 = vector.shape_cast %8 : vector<1x8x128xf32> to vector<8x128xf32>
    %c5 = arith.constant 5 : index
    %c0_10 = arith.constant 0 : index
    %c0_11 = arith.constant 0 : index
    %10 = vector.load %arg1[%c5, %c0_10, %c0_11] : memref<8x8x128xf32, #tpu.memory_space<vmem>>, vector<1x8x128xf32>
    %11 = vector.shape_cast %10 : vector<1x8x128xf32> to vector<8x128xf32>
    %c6 = arith.constant 6 : index
    %c0_12 = arith.constant 0 : index
    %c0_13 = arith.constant 0 : index
    %12 = vector.load %arg1[%c6, %c0_12, %c0_13] : memref<8x8x128xf32, #tpu.memory_space<vmem>>, vector<1x8x128xf32>
    %13 = vector.shape_cast %12 : vector<1x8x128xf32> to vector<8x128xf32>
    %c7 = arith.constant 7 : index
    %c0_14 = arith.constant 0 : index
    %c0_15 = arith.constant 0 : index
    %14 = vector.load %arg1[%c7, %c0_14, %c0_15] : memref<8x8x128xf32, #tpu.memory_space<vmem>>, vector<1x8x128xf32>
    %15 = vector.shape_cast %14 : vector<1x8x128xf32> to vector<8x128xf32>
    %16 = arith.subf %5, %1 : vector<8x128xf32>
    %17 = arith.subf %7, %3 : vector<8x128xf32>
    %18 = arith.mulf %16, %17 : vector<8x128xf32>
    %19 = arith.subf %13, %9 : vector<8x128xf32>
    %20 = arith.subf %15, %11 : vector<8x128xf32>
    %21 = arith.mulf %19, %20 : vector<8x128xf32>
    %22 = arith.minimumf %5, %13 : vector<8x128xf32>
    %23 = arith.maximumf %1, %9 : vector<8x128xf32>
    %24 = arith.subf %22, %23 : vector<8x128xf32>
    %cst = arith.constant 0.000000e+00 : f32
    %25 = vector.broadcast %cst : f32 to vector<8x128xf32>
    %26 = arith.maximumf %24, %25 : vector<8x128xf32>
    %27 = arith.minimumf %7, %15 : vector<8x128xf32>
    %28 = arith.maximumf %3, %11 : vector<8x128xf32>
    %29 = arith.subf %27, %28 : vector<8x128xf32>
    %cst_16 = arith.constant 0.000000e+00 : f32
    %30 = vector.broadcast %cst_16 : f32 to vector<8x128xf32>
    %31 = arith.maximumf %29, %30 : vector<8x128xf32>
    %32 = arith.mulf %26, %31 : vector<8x128xf32>
    %33 = arith.addf %18, %21 : vector<8x128xf32>
    %34 = arith.subf %33, %32 : vector<8x128xf32>
    %35 = arith.maximumf %5, %13 : vector<8x128xf32>
    %36 = arith.minimumf %1, %9 : vector<8x128xf32>
    %37 = arith.subf %35, %36 : vector<8x128xf32>
    %cst_17 = arith.constant 0.000000e+00 : f32
    %38 = vector.broadcast %cst_17 : f32 to vector<8x128xf32>
    %39 = arith.maximumf %37, %38 : vector<8x128xf32>
    %40 = arith.maximumf %7, %15 : vector<8x128xf32>
    %41 = arith.minimumf %3, %11 : vector<8x128xf32>
    %42 = arith.subf %40, %41 : vector<8x128xf32>
    %cst_18 = arith.constant 0.000000e+00 : f32
    %43 = vector.broadcast %cst_18 : f32 to vector<8x128xf32>
    %44 = arith.maximumf %42, %43 : vector<8x128xf32>
    %45 = arith.mulf %39, %44 : vector<8x128xf32>
    %46 = tpu.reciprocal %34 {approx = true} : vector<8x128xf32> -> vector<8x128xf32>
    %47 = tpu.reciprocal %45 {approx = true} : vector<8x128xf32> -> vector<8x128xf32>
    %48 = arith.mulf %32, %46 : vector<8x128xf32>
    %cst_19 = arith.constant 2.000000e+00 : f32
    %49 = vector.broadcast %cst_19 : f32 to vector<8x128xf32>
    %50 = arith.subf %49, %48 : vector<8x128xf32>
    %51 = arith.mulf %34, %47 : vector<8x128xf32>
    %52 = arith.subf %50, %51 : vector<8x128xf32>
    %c0_20 = arith.constant 0 : index
    %c0_21 = arith.constant 0 : index
    %53 = vector.load %arg2[%c0_20, %c0_21] : memref<8x128xf32, #tpu.memory_space<vmem>>, vector<8x128xf32>
    tpu.vector_store %arg2[%c0_20, %c0_21], %52 {strides = array<i32>} : memref<8x128xf32, #tpu.memory_space<vmem>>, vector<8x128xf32>,
    return
  }
  func.func @transform_0(%arg0: i32) -> (i32, i32, i32) {
    %c0_i32 = arith.constant 0 : i32
    %c0_i32_0 = arith.constant 0 : i32
    %c0_i32_1 = arith.constant 0 : i32
    return %c0_i32, %arg0, %c0_i32_0 : i32, i32, i32
  }
  func.func @transform_1(%arg0: i32) -> (i32, i32) {
    %c0_i32 = arith.constant 0 : i32
    %c0_i32_0 = arith.constant 0 : i32
    return %arg0, %c0_i32 : i32, i32
  }
}

</mosaic_0001>

<llo_original>
// kernel: tpu_custom_call.1
$region0: #{tpu_custom_call.1}
  #allocation0 [shape = 'u32[]', space=smem, size = 0x4, offset = 0x4, fixed_abs, tag = 'smem constant byte address 0x4 - core index']
  #allocation1 [shape = 'u32[144,128]{1,0:T(1,128)}', space=vmem, size = 0x12000, scoped, tag = 'internal scratch']
  %s0 = inlined_call_operand.hbm [shape: f32[8,8,128], index: 0, kind: input, shape index: {}]
  %s1 = inlined_call_operand.hbm [shape: f32[8,128], index: 1, kind: output, shape index: {}]
  %s2 = sld [smem:[#allocation0]]
  $region18: #{tpu_custom_call.1} parent=0
    _
  %s4 = ssub.s32 1, %s2
  %s5 = scalar_select 0, %s4, %s2
  $region1: #{tpu_custom_call.1} parent=0
    #allocation2 [shape = 'u8[32768]{0}', space=vmem, size = 0x8000, scoped, tag = 'input window, operand 0, single buffered']
    #allocation3 [shape = 's32[1]{0}', space=sflag, size = 0x4, scoped, tag = 'scoped memory for tpu_custom_call.1']
    #allocation4 [shape = 's32[1]{0}', space=sflag, size = 0x4, scoped, tag = 'scoped memory for tpu_custom_call.1']
    #allocation5 [shape = 'u8[4096]{0}', space=vmem, size = 0x1000, scoped, tag = 'output window, operand 0, single buffered']
    %6 = vsyncpa [#allocation3], 0
    %7 = vsyncpa [#allocation4], 0
    // Predicated region
    $region2: #{tpu_custom_call.1} parent=1 // pred_check
      _
    $region3: #{tpu_custom_call.1} parent=1 // pred_check_branch
      %9 = sbr.rel (0) target = $region5
    $region4: #{tpu_custom_call.1} parent=1 // pred_region
      %s11 = ssub.s32 1024, 1024
      %12 = vsyncadd [#allocation3], %s11
      %s13 = sshll.u32 [#allocation2], 4
      %s14 = int_to_ptr.vmem [resolvable:$true] %s13
      %19 = dma.hbm_to_vmem [thread:$0]  %s0, 1024, %s14, [#allocation3], 128, 128, 8
    $region5: #{tpu_custom_call.1} parent=1 // pred_fallthru
      _
    // Predicated region
    $region6: #{tpu_custom_call.1} parent=1 // pred_check
      _
    $region7: #{tpu_custom_call.1} parent=1 // pred_check_branch
      %21 = sbr.rel (0) target = $region9
    $region8: #{tpu_custom_call.1} parent=1 // pred_region
      %22 = dma.done [#allocation3], 1024
    $region9: #{tpu_custom_call.1} parent=1 // pred_fallthru
      _
    %v23 = vld [vmem:[#allocation2] sm:$0xff]
    %s24 = scalar_lea.vmem [#allocation2], 8
    %v25 = vld [vmem:[%s24] sm:$0xff]
    %s26 = scalar_lea.vmem [#allocation2], 16
    %v27 = vld [vmem:[%s26] sm:$0xff]
    %s28 = scalar_lea.vmem [#allocation2], 24
    %v29 = vld [vmem:[%s28] sm:$0xff]
    %s30 = scalar_lea.vmem [#allocation2], 32
    %v31 = vld [vmem:[%s30] sm:$0xff]
    %s32 = scalar_lea.vmem [#allocation2], 40
    %v33 = vld [vmem:[%s32] sm:$0xff]
    %s34 = scalar_lea.vmem [#allocation2], 48
    %v35 = vld [vmem:[%s34] sm:$0xff]
    %s36 = scalar_lea.vmem [#allocation2], 56
    %v37 = vld [vmem:[%s36] sm:$0xff]
    %v38 = vsub.f32 %v27, %v23
    %v39 = vsub.f32 %v29, %v25
    %v40 = vmul.f32 %v38, %v39
    %v41 = vsub.f32 %v35, %v31
    %v42 = vsub.f32 %v37, %v33
    %v43 = vmul.f32 %v41, %v42
    %v44 = vmin.f32 %v27, %v35
    %v45 = vmax.f32 %v23, %v31
    %v46 = vsub.f32 %v44, %v45
    %v47 = vmax.f32 %v46, 0.0
    %v48 = vmin.f32 %v29, %v37
    %v49 = vmax.f32 %v25, %v33
    %v50 = vsub.f32 %v48, %v49
    %v51 = vmax.f32 %v50, 0.0
    %v52 = vmul.f32 %v47, %v51
    %v53 = vadd.f32 %v40, %v43
    %v54 = vsub.f32 %v53, %v52
    %v55 = vmax.f32 %v27, %v35
    %v56 = vmin.f32 %v23, %v31
    %v57 = vsub.f32 %v55, %v56
    %v58 = vmax.f32 %v57, 0.0
    %v59 = vmax.f32 %v29, %v37
    %v60 = vmin.f32 %v25, %v33
    %v61 = vsub.f32 %v59, %v60
    %v62 = vmax.f32 %v61, 0.0
    %v63 = vmul.f32 %v58, %v62
    %v64 = vrcp.pop %v54
    %v65 = vrcp.pop %v63
    %v66 = vmul.f32 %v52, %v64
    %v67 = vsub.f32 2.0, %v66
    %v68 = vmul.f32 %v54, %v65
    %v69 = vsub.f32 %v67, %v68
    %70 = vst [vmem:[#allocation5] sm:$0xff] %v69
    // Predicated region
    $region10: #{tpu_custom_call.1} parent=1 // pred_check
      _
    $region11: #{tpu_custom_call.1} parent=1 // pred_check_branch
      %72 = sbr.rel (0) target = $region13
    $region12: #{tpu_custom_call.1} parent=1 // pred_region
      %s74 = ssub.s32 128, 128
      %75 = vsyncadd [#allocation4], %s74
      %s77 = sshll.u32 [#allocation5], 4
      %s78 = int_to_ptr.vmem [resolvable:$true] %s77
      %80 = dma.vmem_to_hbm [thread:$0]  %s78, 128, %s1, [#allocation4]
    $region13: #{tpu_custom_call.1} parent=1 // pred_fallthru
      _
    // Predicated region
    $region14: #{tpu_custom_call.1} parent=1 // pred_check
      _
    $region15: #{tpu_custom_call.1} parent=1 // pred_check_branch
      %82 = sbr.rel (0) target = $region17
    $region16: #{tpu_custom_call.1} parent=1 // pred_region
      %83 = dma.done [#allocation4], 128
    $region17: #{tpu_custom_call.1} parent=1 // pred_fallthru
      _
    %84 = vsyncpa [#allocation3], 1
    %85 = vsyncpa [#allocation4], 1

</llo_original>
